<compile_context>
chip_gen: v7x
topology: tpu7x:2x2x1
jax: 0.10.0
libtpu: 0.0.40
codegen_flags: <defaults>
</compile_context>

<pallas_src>
import jax
import jax.numpy as jnp
import numpy as np
from jax.experimental import pallas as pl
from jax.experimental.pallas import tpu as pltpu


# ----------------------------------------------------------------------------
# Pallas kernel: whole recurrence + final linear head in one invocation.
# PyTorch nn.GRU gate order is (r, z, n):
#   r = sigmoid(x W_ir + b_ir + h W_hr + b_hr)
#   z = sigmoid(x W_iz + b_iz + h W_hz + b_hz)
#   n = tanh   (x W_in + b_in + r * (h W_hn + b_hn))
#   h' = (1 - z) * n + z * h  ==  n + z * (h - n)
# gi_ref holds precomputed input-side projections (with b_ih, b_hr, b_hz
# already folded in), time-major and gate-packed:
#   gi_ref[t] = x_t @ W_ih + b_ih (+ [b_hr, b_hz, 0]),  shape (S, B, 3H)
# ----------------------------------------------------------------------------
def gru_kernel(gi_ref, h0_ref, whh_ref, bhhn_ref, wlin_ref, blin_ref,
               logits_ref, hout_ref):
    S = gi_ref.shape[0]
    H = h0_ref.shape[1]

    whh = whh_ref[...]          # (H, 3H) packed hidden weights, loaded once
    bhh_n = bhhn_ref[...]       # (1, H)  only the n-gate hidden bias

    def step(t, h):
        # One lane-dense (B, 3H) load of the hoisted input-side projections.
        gi_t = gi_ref[t]
        # Single packed matmul on the serial dependence chain.
        gh = jnp.dot(h, whh, preferred_element_type=jnp.float32)   # (B, 3H)

        r = jax.nn.sigmoid(gi_t[:, 0 * H:1 * H] + gh[:, 0 * H:1 * H])
        z = jax.nn.sigmoid(gi_t[:, 1 * H:2 * H] + gh[:, 1 * H:2 * H])
        n = jnp.tanh(gi_t[:, 2 * H:3 * H] + r * (gh[:, 2 * H:3 * H] + bhh_n))
        return n + z * (h - n)

    # Hidden state lives in vregs across the (fully unrolled) loop.
    h_last = jax.lax.fori_loop(0, S, step, h0_ref[...], unroll=True)

    hout_ref[...] = h_last
    logits_ref[...] = (
        jnp.dot(h_last, wlin_ref[...], preferred_element_type=jnp.float32)
        + blin_ref[...]
    )


def gru_forward(x_idx, h0, params):
    """Forward pass of the GRU module (inference mode).

    x_idx : (B, S) int32 token indices
    h0    : (1, B, H) float32 initial hidden state
    returns (logits (B, C), h (1, B, H))
    """
    emb = params["embedding"]           # (V, E), row 0 is the padding row (zeros)
    w_ih = params["w_ih"]               # (E, 3H)
    w_hh = params["w_hh"]               # (H, 3H) packed (r, z, n)
    b_ih = params["b_ih"]               # (1, 3H)
    b_hh = params["b_hh"]               # (1, 3H)
    w_lin = params["w_lin"]             # (H, C)
    b_lin = params["b_lin"]             # (1, C)

    B, S = x_idx.shape
    H = w_hh.shape[0]
    C = w_lin.shape[1]

    # Input projection fully hoisted: project the tiny embedding table once,
    # then gather per token.  (emb @ W_ih)[i] == emb[i] @ W_ih exactly.
    # Fold b_hr / b_hz into the hoisted projection (they are pure adds on the
    # r/z gates); b_hn must stay in-kernel (applied inside r * (...)).
    bhh_fold = jnp.concatenate(
        [b_hh[:, :2 * H], jnp.zeros((1, H), jnp.float32)], axis=1)   # (1, 3H)
    proj = emb @ w_ih + b_ih + bhh_fold                              # (V, 3H)
    gi = jnp.take(proj, x_idx, axis=0)                               # (B, S, 3H)
    gi = jnp.transpose(gi, (1, 0, 2))                                # (S, B, 3H)

    bhh_n = b_hh[:, 2 * H:3 * H]                                     # (1, H)
    h0_2d = h0[0]                                                    # (B, H)

    full = lambda shape: pl.BlockSpec(shape, lambda i: tuple(0 for _ in shape))

    logits, h_last = pl.pallas_call(
        gru_kernel,
        out_shape=(jax.ShapeDtypeStruct((B, C), jnp.float32),
                   jax.ShapeDtypeStruct((B, H), jnp.float32)),
        grid_spec=pltpu.PrefetchScalarGridSpec(
            num_scalar_prefetch=0,
            grid=(1,),                       # single invocation; loop is in-kernel
            in_specs=[
                full((S, B, 3 * H)),         # precomputed, gate-packed input projs
                full((B, H)),                # h0
                full((H, 3 * H)),            # W_hh packed
                full((1, H)),                # b_hn only
                full((H, C)),                # W_lin^T
                full((1, C)),                # b_lin
            ],
            out_specs=[
                full((B, C)),                # logits (written once; lane-sparse OK)
                full((B, H)),                # h_last
            ],
        ),
        compiler_params=pltpu.CompilerParams(
            dimension_semantics=("arbitrary",)),
    )(gi, h0_2d, w_hh, bhh_n, w_lin, b_lin)

    # dropout(p=0.3) is identity in eval mode; x[:, -1, :] == h_last for a
    # unidirectional single-layer GRU, so logits = linear(h_last).
    return logits, h_last[None, :, :]


# ----------------------------------------------------------------------------
# Pure-JAX reference (lax.scan) used as a correctness oracle.
# ----------------------------------------------------------------------------
def gru_forward_ref(x_idx, h0, params):
    emb = params["embedding"]
    w_ih, w_hh = params["w_ih"], params["w_hh"]
    b_ih, b_hh = params["b_ih"][0], params["b_hh"][0]
    w_lin, b_lin = params["w_lin"], params["b_lin"][0]
    H = w_hh.shape[0]

    x_emb = jnp.take(emb, x_idx, axis=0)        # (B, S, E)
    x_tm = jnp.transpose(x_emb, (1, 0, 2))      # (S, B, E)

    def step(h, x_t):
        gi = x_t @ w_ih + b_ih
        gh = h @ w_hh + b_hh
        r = jax.nn.sigmoid(gi[:, 0 * H:1 * H] + gh[:, 0 * H:1 * H])
        z = jax.nn.sigmoid(gi[:, 1 * H:2 * H] + gh[:, 1 * H:2 * H])
        n = jnp.tanh(gi[:, 2 * H:3 * H] + r * gh[:, 2 * H:3 * H])
        h_new = (1.0 - z) * n + z * h
        return h_new, None

    h_last, _ = jax.lax.scan(step, h0[0], x_tm)
    logits = h_last @ w_lin + b_lin
    return logits, h_last[None, :, :]


def init_params(key, vocab, emb_size, hidden, num_categories):
    """Deterministic parameter init mirroring nn.Embedding / nn.GRU / nn.Linear."""
    ks = jax.random.split(key, 8)
    k_gru = 1.0 / np.sqrt(hidden)
    k_lin = 1.0 / np.sqrt(hidden)

    embedding = jax.random.normal(ks[0], (vocab, emb_size), jnp.float32)
    embedding = embedding.at[0].set(0.0)                       # padding_idx=0

    w_ih = jax.random.uniform(ks[1], (emb_size, 3 * hidden), jnp.float32, -k_gru, k_gru)
    w_hh = jax.random.uniform(ks[2], (hidden, 3 * hidden), jnp.float32, -k_gru, k_gru)
    b_ih = jax.random.uniform(ks[3], (1, 3 * hidden), jnp.float32, -k_gru, k_gru)
    b_hh = jax.random.uniform(ks[4], (1, 3 * hidden), jnp.float32, -k_gru, k_gru)

    w_lin = jax.random.uniform(ks[5], (hidden, num_categories), jnp.float32, -k_lin, k_lin)
    b_lin = jax.random.uniform(ks[6], (1, num_categories), jnp.float32, -k_lin, k_lin)

    return {"embedding": embedding, "w_ih": w_ih, "w_hh": w_hh,
            "b_ih": b_ih, "b_hh": b_hh, "w_lin": w_lin, "b_lin": b_lin}


if __name__ == "__main__":
    # Small shapes consistent with the module.
    VOCAB, EMB, HIDDEN, NCAT = 20, 32, 32, 4
    BATCH, SEQ = 8, 8

    key = jax.random.PRNGKey(0)
    k_param, k_x = jax.random.split(key)

    params = init_params(k_param, VOCAB, EMB, HIDDEN, NCAT)
    x_idx = jax.random.randint(k_x, (BATCH, SEQ), 0, VOCAB, dtype=jnp.int32)
    h0 = jnp.zeros((1, BATCH, HIDDEN), jnp.float32)            # init_hidden(batch)

    logits, h = jax.block_until_ready(gru_forward(x_idx, h0, params))

    logits_ref, h_ref = gru_forward_ref(x_idx, h0, params)
    np.testing.assert_allclose(np.asarray(logits), np.asarray(logits_ref),
                               rtol=1e-4, atol=1e-4)
    np.testing.assert_allclose(np.asarray(h), np.asarray(h_ref),
                               rtol=1e-4, atol=1e-4)

    assert logits.shape == (BATCH, NCAT)
    assert h.shape == (1, BATCH, HIDDEN)
    print("KERNEL_OK")
</pallas_src>

<mosaic_0001>
module attributes {stable_mosaic.version = 11 : i64} {
  func.func @gru_kernel(%arg0: i32, %arg1: memref<8x8x96xf32, #tpu.memory_space<vmem>>, %arg2: memref<8x32xf32, #tpu.memory_space<vmem>>, %arg3: memref<32x96xf32, #tpu.memory_space<vmem>>, %arg4: memref<1x32xf32, #tpu.memory_space<vmem>>, %arg5: memref<32x4xf32, #tpu.memory_space<vmem>>, %arg6: memref<1x4xf32, #tpu.memory_space<vmem>>, %arg7: memref<8x4xf32, #tpu.memory_space<vmem>>, %arg8: memref<8x32xf32, #tpu.memory_space<vmem>>) attributes {dimension_semantics = [#tpu.dimension_semantics<arbitrary>], iteration_bounds = array<i64: 1>, scalar_prefetch = 0 : i64, scratch_operands = 0 : i64, tpu.core_type = #tpu.core_type<tc>, window_params = [{pipeline_mode = #tpu.pipeline_mode<synchronous>, transform_indices = @transform_0, window_bounds = array<i64: 8, 8, 96>}, {pipeline_mode = #tpu.pipeline_mode<synchronous>, transform_indices = @transform_1, window_bounds = array<i64: 8, 32>}, {pipeline_mode = #tpu.pipeline_mode<synchronous>, transform_indices = @transform_2, window_bounds = array<i64: 32, 96>}, {pipeline_mode = #tpu.pipeline_mode<synchronous>, transform_indices = @transform_3, window_bounds = array<i64: 1, 32>}, {pipeline_mode = #tpu.pipeline_mode<synchronous>, transform_indices = @transform_4, window_bounds = array<i64: 32, 4>}, {pipeline_mode = #tpu.pipeline_mode<synchronous>, transform_indices = @transform_5, window_bounds = array<i64: 1, 4>}, {pipeline_mode = #tpu.pipeline_mode<synchronous>, transform_indices = @transform_6, window_bounds = array<i64: 8, 4>}, {pipeline_mode = #tpu.pipeline_mode<synchronous>, transform_indices = @transform_7, window_bounds = array<i64: 8, 32>}]} {
    %c0 = arith.constant 0 : index
    %c0_0 = arith.constant 0 : index
    %0 = vector.load %arg3[%c0, %c0_0] : memref<32x96xf32, #tpu.memory_space<vmem>>, vector<32x96xf32>
    %c0_1 = arith.constant 0 : index
    %c0_2 = arith.constant 0 : index
    %1 = vector.load %arg4[%c0_1, %c0_2] : memref<1x32xf32, #tpu.memory_space<vmem>>, vector<1x32xf32>
    %c0_3 = arith.constant 0 : index
    %c0_4 = arith.constant 0 : index
    %2 = vector.load %arg2[%c0_3, %c0_4] : memref<8x32xf32, #tpu.memory_space<vmem>>, vector<8x32xf32>
    %c0_i32 = arith.constant 0 : i32
    %3 = arith.index_cast %c0_i32 : i32 to index
    %c0_5 = arith.constant 0 : index
    %c0_6 = arith.constant 0 : index
    %4 = vector.load %arg1[%3, %c0_5, %c0_6] : memref<8x8x96xf32, #tpu.memory_space<vmem>>, vector<1x8x96xf32>
    %5 = vector.shape_cast %4 : vector<1x8x96xf32> to vector<8x96xf32>
    %cst = arith.constant dense<0.000000e+00> : vector<8x96xf32>
    %6 = tpu.matmul %2, %0, %cst {dimension_numbers = #tpu.dot_dimension_numbers<[1], [0], [0], [1], [0, 0, 1, 1], [], []>} : vector<8x32xf32>, vector<32x96xf32>, vector<8x96xf32> -> vector<8x96xf32>
    %7 = vector.extract_strided_slice %5 {offsets = [0, 0], sizes = [8, 32], strides = [1, 1]} : vector<8x96xf32> to vector<8x32xf32>
    %8 = vector.extract_strided_slice %6 {offsets = [0, 0], sizes = [8, 32], strides = [1, 1]} : vector<8x96xf32> to vector<8x32xf32>
    %9 = arith.addf %7, %8 : vector<8x32xf32>
    %10 = arith.negf %9 : vector<8x32xf32>
    %11 = math.exp %10 : vector<8x32xf32>
    %cst_7 = arith.constant 1.000000e+00 : f32
    %12 = vector.broadcast %cst_7 : f32 to vector<8x32xf32>
    %13 = arith.addf %12, %11 : vector<8x32xf32>
    %14 = arith.divf %12, %13 : vector<8x32xf32>
    %15 = vector.extract_strided_slice %5 {offsets = [0, 32], sizes = [8, 32], strides = [1, 1]} : vector<8x96xf32> to vector<8x32xf32>
    %16 = vector.extract_strided_slice %6 {offsets = [0, 32], sizes = [8, 32], strides = [1, 1]} : vector<8x96xf32> to vector<8x32xf32>
    %17 = arith.addf %15, %16 : vector<8x32xf32>
    %18 = arith.negf %17 : vector<8x32xf32>
    %19 = math.exp %18 : vector<8x32xf32>
    %cst_8 = arith.constant 1.000000e+00 : f32
    %20 = vector.broadcast %cst_8 : f32 to vector<8x32xf32>
    %21 = arith.addf %20, %19 : vector<8x32xf32>
    %22 = arith.divf %20, %21 : vector<8x32xf32>
    %23 = vector.extract_strided_slice %5 {offsets = [0, 64], sizes = [8, 32], strides = [1, 1]} : vector<8x96xf32> to vector<8x32xf32>
    %24 = vector.extract_strided_slice %6 {offsets = [0, 64], sizes = [8, 32], strides = [1, 1]} : vector<8x96xf32> to vector<8x32xf32>
    %25 = vector.broadcast %1 : vector<1x32xf32> to vector<8x32xf32>
    %26 = arith.addf %24, %25 : vector<8x32xf32>
    %27 = arith.mulf %14, %26 : vector<8x32xf32>
    %28 = arith.addf %23, %27 : vector<8x32xf32>
    %29 = math.tanh %28 : vector<8x32xf32>
    %30 = arith.subf %2, %29 : vector<8x32xf32>
    %31 = arith.mulf %22, %30 : vector<8x32xf32>
    %32 = arith.addf %29, %31 : vector<8x32xf32>
    %c1_i32 = arith.constant 1 : i32
    %33 = arith.index_cast %c1_i32 : i32 to index
    %c0_9 = arith.constant 0 : index
    %c0_10 = arith.constant 0 : index
    %34 = vector.load %arg1[%33, %c0_9, %c0_10] : memref<8x8x96xf32, #tpu.memory_space<vmem>>, vector<1x8x96xf32>
    %35 = vector.shape_cast %34 : vector<1x8x96xf32> to vector<8x96xf32>
    %cst_11 = arith.constant dense<0.000000e+00> : vector<8x96xf32>
    %36 = tpu.matmul %32, %0, %cst_11 {dimension_numbers = #tpu.dot_dimension_numbers<[1], [0], [0], [1], [0, 0, 1, 1], [], []>} : vector<8x32xf32>, vector<32x96xf32>, vector<8x96xf32> -> vector<8x96xf32>
    %37 = vector.extract_strided_slice %35 {offsets = [0, 0], sizes = [8, 32], strides = [1, 1]} : vector<8x96xf32> to vector<8x32xf32>
    %38 = vector.extract_strided_slice %36 {offsets = [0, 0], sizes = [8, 32], strides = [1, 1]} : vector<8x96xf32> to vector<8x32xf32>
    %39 = arith.addf %37, %38 : vector<8x32xf32>
    %40 = arith.negf %39 : vector<8x32xf32>
    %41 = math.exp %40 : vector<8x32xf32>
    %cst_12 = arith.constant 1.000000e+00 : f32
    %42 = vector.broadcast %cst_12 : f32 to vector<8x32xf32>
    %43 = arith.addf %42, %41 : vector<8x32xf32>
    %44 = arith.divf %42, %43 : vector<8x32xf32>
    %45 = vector.extract_strided_slice %35 {offsets = [0, 32], sizes = [8, 32], strides = [1, 1]} : vector<8x96xf32> to vector<8x32xf32>
    %46 = vector.extract_strided_slice %36 {offsets = [0, 32], sizes = [8, 32], strides = [1, 1]} : vector<8x96xf32> to vector<8x32xf32>
    %47 = arith.addf %45, %46 : vector<8x32xf32>
    %48 = arith.negf %47 : vector<8x32xf32>
    %49 = math.exp %48 : vector<8x32xf32>
    %cst_13 = arith.constant 1.000000e+00 : f32
    %50 = vector.broadcast %cst_13 : f32 to vector<8x32xf32>
    %51 = arith.addf %50, %49 : vector<8x32xf32>
    %52 = arith.divf %50, %51 : vector<8x32xf32>
    %53 = vector.extract_strided_slice %35 {offsets = [0, 64], sizes = [8, 32], strides = [1, 1]} : vector<8x96xf32> to vector<8x32xf32>
    %54 = vector.extract_strided_slice %36 {offsets = [0, 64], sizes = [8, 32], strides = [1, 1]} : vector<8x96xf32> to vector<8x32xf32>
    %55 = vector.broadcast %1 : vector<1x32xf32> to vector<8x32xf32>
    %56 = arith.addf %54, %55 : vector<8x32xf32>
    %57 = arith.mulf %44, %56 : vector<8x32xf32>
    %58 = arith.addf %53, %57 : vector<8x32xf32>
    %59 = math.tanh %58 : vector<8x32xf32>
    %60 = arith.subf %32, %59 : vector<8x32xf32>
    %61 = arith.mulf %52, %60 : vector<8x32xf32>
    %62 = arith.addf %59, %61 : vector<8x32xf32>
    %c2_i32 = arith.constant 2 : i32
    %63 = arith.index_cast %c2_i32 : i32 to index
    %c0_14 = arith.constant 0 : index
    %c0_15 = arith.constant 0 : index
    %64 = vector.load %arg1[%63, %c0_14, %c0_15] : memref<8x8x96xf32, #tpu.memory_space<vmem>>, vector<1x8x96xf32>
    %65 = vector.shape_cast %64 : vector<1x8x96xf32> to vector<8x96xf32>
    %cst_16 = arith.constant dense<0.000000e+00> : vector<8x96xf32>
    %66 = tpu.matmul %62, %0, %cst_16 {dimension_numbers = #tpu.dot_dimension_numbers<[1], [0], [0], [1], [0, 0, 1, 1], [], []>} : vector<8x32xf32>, vector<32x96xf32>, vector<8x96xf32> -> vector<8x96xf32>
    %67 = vector.extract_strided_slice %65 {offsets = [0, 0], sizes = [8, 32], strides = [1, 1]} : vector<8x96xf32> to vector<8x32xf32>
    %68 = vector.extract_strided_slice %66 {offsets = [0, 0], sizes = [8, 32], strides = [1, 1]} : vector<8x96xf32> to vector<8x32xf32>
    %69 = arith.addf %67, %68 : vector<8x32xf32>
    %70 = arith.negf %69 : vector<8x32xf32>
    %71 = math.exp %70 : vector<8x32xf32>
    %cst_17 = arith.constant 1.000000e+00 : f32
    %72 = vector.broadcast %cst_17 : f32 to vector<8x32xf32>
    %73 = arith.addf %72, %71 : vector<8x32xf32>
    %74 = arith.divf %72, %73 : vector<8x32xf32>
    %75 = vector.extract_strided_slice %65 {offsets = [0, 32], sizes = [8, 32], strides = [1, 1]} : vector<8x96xf32> to vector<8x32xf32>
    %76 = vector.extract_strided_slice %66 {offsets = [0, 32], sizes = [8, 32], strides = [1, 1]} : vector<8x96xf32> to vector<8x32xf32>
    %77 = arith.addf %75, %76 : vector<8x32xf32>
    %78 = arith.negf %77 : vector<8x32xf32>
    %79 = math.exp %78 : vector<8x32xf32>
    %cst_18 = arith.constant 1.000000e+00 : f32
    %80 = vector.broadcast %cst_18 : f32 to vector<8x32xf32>
    %81 = arith.addf %80, %79 : vector<8x32xf32>
    %82 = arith.divf %80, %81 : vector<8x32xf32>
    %83 = vector.extract_strided_slice %65 {offsets = [0, 64], sizes = [8, 32], strides = [1, 1]} : vector<8x96xf32> to vector<8x32xf32>
    %84 = vector.extract_strided_slice %66 {offsets = [0, 64], sizes = [8, 32], strides = [1, 1]} : vector<8x96xf32> to vector<8x32xf32>
    %85 = vector.broadcast %1 : vector<1x32xf32> to vector<8x32xf32>
    %86 = arith.addf %84, %85 : vector<8x32xf32>
    %87 = arith.mulf %74, %86 : vector<8x32xf32>
    %88 = arith.addf %83, %87 : vector<8x32xf32>
    %89 = math.tanh %88 : vector<8x32xf32>
    %90 = arith.subf %62, %89 : vector<8x32xf32>
    %91 = arith.mulf %82, %90 : vector<8x32xf32>
    %92 = arith.addf %89, %91 : vector<8x32xf32>
    %c3_i32 = arith.constant 3 : i32
    %93 = arith.index_cast %c3_i32 : i32 to index
    %c0_19 = arith.constant 0 : index
    %c0_20 = arith.constant 0 : index
    %94 = vector.load %arg1[%93, %c0_19, %c0_20] : memref<8x8x96xf32, #tpu.memory_space<vmem>>, vector<1x8x96xf32>
    %95 = vector.shape_cast %94 : vector<1x8x96xf32> to vector<8x96xf32>
    %cst_21 = arith.constant dense<0.000000e+00> : vector<8x96xf32>
    %96 = tpu.matmul %92, %0, %cst_21 {dimension_numbers = #tpu.dot_dimension_numbers<[1], [0], [0], [1], [0, 0, 1, 1], [], []>} : vector<8x32xf32>, vector<32x96xf32>, vector<8x96xf32> -> vector<8x96xf32>
    %97 = vector.extract_strided_slice %95 {offsets = [0, 0], sizes = [8, 32], strides = [1, 1]} : vector<8x96xf32> to vector<8x32xf32>
    %98 = vector.extract_strided_slice %96 {offsets = [0, 0], sizes = [8, 32], strides = [1, 1]} : vector<8x96xf32> to vector<8x32xf32>
    %99 = arith.addf %97, %98 : vector<8x32xf32>
    %100 = arith.negf %99 : vector<8x32xf32>
    %101 = math.exp %100 : vector<8x32xf32>
    %cst_22 = arith.constant 1.000000e+00 : f32
    %102 = vector.broadcast %cst_22 : f32 to vector<8x32xf32>
    %103 = arith.addf %102, %101 : vector<8x32xf32>
    %104 = arith.divf %102, %103 : vector<8x32xf32>
    %105 = vector.extract_strided_slice %95 {offsets = [0, 32], sizes = [8, 32], strides = [1, 1]} : vector<8x96xf32> to vector<8x32xf32>
    %106 = vector.extract_strided_slice %96 {offsets = [0, 32], sizes = [8, 32], strides = [1, 1]} : vector<8x96xf32> to vector<8x32xf32>
    %107 = arith.addf %105, %106 : vector<8x32xf32>
    %108 = arith.negf %107 : vector<8x32xf32>
    %109 = math.exp %108 : vector<8x32xf32>
    %cst_23 = arith.constant 1.000000e+00 : f32
    %110 = vector.broadcast %cst_23 : f32 to vector<8x32xf32>
    %111 = arith.addf %110, %109 : vector<8x32xf32>
    %112 = arith.divf %110, %111 : vector<8x32xf32>
    %113 = vector.extract_strided_slice %95 {offsets = [0, 64], sizes = [8, 32], strides = [1, 1]} : vector<8x96xf32> to vector<8x32xf32>
    %114 = vector.extract_strided_slice %96 {offsets = [0, 64], sizes = [8, 32], strides = [1, 1]} : vector<8x96xf32> to vector<8x32xf32>
    %115 = vector.broadcast %1 : vector<1x32xf32> to vector<8x32xf32>
    %116 = arith.addf %114, %115 : vector<8x32xf32>
    %117 = arith.mulf %104, %116 : vector<8x32xf32>
    %118 = arith.addf %113, %117 : vector<8x32xf32>
    %119 = math.tanh %118 : vector<8x32xf32>
    %120 = arith.subf %92, %119 : vector<8x32xf32>
    %121 = arith.mulf %112, %120 : vector<8x32xf32>
    %122 = arith.addf %119, %121 : vector<8x32xf32>
    %c4_i32 = arith.constant 4 : i32
    %123 = arith.index_cast %c4_i32 : i32 to index
    %c0_24 = arith.constant 0 : index
    %c0_25 = arith.constant 0 : index
    %124 = vector.load %arg1[%123, %c0_24, %c0_25] : memref<8x8x96xf32, #tpu.memory_space<vmem>>, vector<1x8x96xf32>
    %125 = vector.shape_cast %124 : vector<1x8x96xf32> to vector<8x96xf32>
    %cst_26 = arith.constant dense<0.000000e+00> : vector<8x96xf32>
    %126 = tpu.matmul %122, %0, %cst_26 {dimension_numbers = #tpu.dot_dimension_numbers<[1], [0], [0], [1], [0, 0, 1, 1], [], []>} : vector<8x32xf32>, vector<32x96xf32>, vector<8x96xf32> -> vector<8x96xf32>
    %127 = vector.extract_strided_slice %125 {offsets = [0, 0], sizes = [8, 32], strides = [1, 1]} : vector<8x96xf32> to vector<8x32xf32>
    %128 = vector.extract_strided_slice %126 {offsets = [0, 0], sizes = [8, 32], strides = [1, 1]} : vector<8x96xf32> to vector<8x32xf32>
    %129 = arith.addf %127, %128 : vector<8x32xf32>
    %130 = arith.negf %129 : vector<8x32xf32>
    %131 = math.exp %130 : vector<8x32xf32>
    %cst_27 = arith.constant 1.000000e+00 : f32
    %132 = vector.broadcast %cst_27 : f32 to vector<8x32xf32>
    %133 = arith.addf %132, %131 : vector<8x32xf32>
    %134 = arith.divf %132, %133 : vector<8x32xf32>
    %135 = vector.extract_strided_slice %125 {offsets = [0, 32], sizes = [8, 32], strides = [1, 1]} : vector<8x96xf32> to vector<8x32xf32>
    %136 = vector.extract_strided_slice %126 {offsets = [0, 32], sizes = [8, 32], strides = [1, 1]} : vector<8x96xf32> to vector<8x32xf32>
    %137 = arith.addf %135, %136 : vector<8x32xf32>
    %138 = arith.negf %137 : vector<8x32xf32>
    %139 = math.exp %138 : vector<8x32xf32>
    %cst_28 = arith.constant 1.000000e+00 : f32
    %140 = vector.broadcast %cst_28 : f32 to vector<8x32xf32>
    %141 = arith.addf %140, %139 : vector<8x32xf32>
    %142 = arith.divf %140, %141 : vector<8x32xf32>
    %143 = vector.extract_strided_slice %125 {offsets = [0, 64], sizes = [8, 32], strides = [1, 1]} : vector<8x96xf32> to vector<8x32xf32>
    %144 = vector.extract_strided_slice %126 {offsets = [0, 64], sizes = [8, 32], strides = [1, 1]} : vector<8x96xf32> to vector<8x32xf32>
    %145 = vector.broadcast %1 : vector<1x32xf32> to vector<8x32xf32>
    %146 = arith.addf %144, %145 : vector<8x32xf32>
    %147 = arith.mulf %134, %146 : vector<8x32xf32>
    %148 = arith.addf %143, %147 : vector<8x32xf32>
    %149 = math.tanh %148 : vector<8x32xf32>
    %150 = arith.subf %122, %149 : vector<8x32xf32>
    %151 = arith.mulf %142, %150 : vector<8x32xf32>
    %152 = arith.addf %149, %151 : vector<8x32xf32>
    %c5_i32 = arith.constant 5 : i32
    %153 = arith.index_cast %c5_i32 : i32 to index
    %c0_29 = arith.constant 0 : index
    %c0_30 = arith.constant 0 : index
    %154 = vector.load %arg1[%153, %c0_29, %c0_30] : memref<8x8x96xf32, #tpu.memory_space<vmem>>, vector<1x8x96xf32>
    %155 = vector.shape_cast %154 : vector<1x8x96xf32> to vector<8x96xf32>
    %cst_31 = arith.constant dense<0.000000e+00> : vector<8x96xf32>
    %156 = tpu.matmul %152, %0, %cst_31 {dimension_numbers = #tpu.dot_dimension_numbers<[1], [0], [0], [1], [0, 0, 1, 1], [], []>} : vector<8x32xf32>, vector<32x96xf32>, vector<8x96xf32> -> vector<8x96xf32>
    %157 = vector.extract_strided_slice %155 {offsets = [0, 0], sizes = [8, 32], strides = [1, 1]} : vector<8x96xf32> to vector<8x32xf32>
    %158 = vector.extract_strided_slice %156 {offsets = [0, 0], sizes = [8, 32], strides = [1, 1]} : vector<8x96xf32> to vector<8x32xf32>
    %159 = arith.addf %157, %158 : vector<8x32xf32>
    %160 = arith.negf %159 : vector<8x32xf32>
    %161 = math.exp %160 : vector<8x32xf32>
    %cst_32 = arith.constant 1.000000e+00 : f32
    %162 = vector.broadcast %cst_32 : f32 to vector<8x32xf32>
    %163 = arith.addf %162, %161 : vector<8x32xf32>
    %164 = arith.divf %162, %163 : vector<8x32xf32>
    %165 = vector.extract_strided_slice %155 {offsets = [0, 32], sizes = [8, 32], strides = [1, 1]} : vector<8x96xf32> to vector<8x32xf32>
    %166 = vector.extract_strided_slice %156 {offsets = [0, 32], sizes = [8, 32], strides = [1, 1]} : vector<8x96xf32> to vector<8x32xf32>
    %167 = arith.addf %165, %166 : vector<8x32xf32>
    %168 = arith.negf %167 : vector<8x32xf32>
    %169 = math.exp %168 : vector<8x32xf32>
    %cst_33 = arith.constant 1.000000e+00 : f32
    %170 = vector.broadcast %cst_33 : f32 to vector<8x32xf32>
    %171 = arith.addf %170, %169 : vector<8x32xf32>
    %172 = arith.divf %170, %171 : vector<8x32xf32>
    %173 = vector.extract_strided_slice %155 {offsets = [0, 64], sizes = [8, 32], strides = [1, 1]} : vector<8x96xf32> to vector<8x32xf32>
    %174 = vector.extract_strided_slice %156 {offsets = [0, 64], sizes = [8, 32], strides = [1, 1]} : vector<8x96xf32> to vector<8x32xf32>
    %175 = vector.broadcast %1 : vector<1x32xf32> to vector<8x32xf32>
    %176 = arith.addf %174, %175 : vector<8x32xf32>
    %177 = arith.mulf %164, %176 : vector<8x32xf32>
    %178 = arith.addf %173, %177 : vector<8x32xf32>
    %179 = math.tanh %178 : vector<8x32xf32>
    %180 = arith.subf %152, %179 : vector<8x32xf32>
    %181 = arith.mulf %172, %180 : vector<8x32xf32>
    %182 = arith.addf %179, %181 : vector<8x32xf32>
    %c6_i32 = arith.constant 6 : i32
    %183 = arith.index_cast %c6_i32 : i32 to index
    %c0_34 = arith.constant 0 : index
    %c0_35 = arith.constant 0 : index
    %184 = vector.load %arg1[%183, %c0_34, %c0_35] : memref<8x8x96xf32, #tpu.memory_space<vmem>>, vector<1x8x96xf32>
    %185 = vector.shape_cast %184 : vector<1x8x96xf32> to vector<8x96xf32>
    %cst_36 = arith.constant dense<0.000000e+00> : vector<8x96xf32>
    %186 = tpu.matmul %182, %0, %cst_36 {dimension_numbers = #tpu.dot_dimension_numbers<[1], [0], [0], [1], [0, 0, 1, 1], [], []>} : vector<8x32xf32>, vector<32x96xf32>, vector<8x96xf32> -> vector<8x96xf32>
    %187 = vector.extract_strided_slice %185 {offsets = [0, 0], sizes = [8, 32], strides = [1, 1]} : vector<8x96xf32> to vector<8x32xf32>
    %188 = vector.extract_strided_slice %186 {offsets = [0, 0], sizes = [8, 32], strides = [1, 1]} : vector<8x96xf32> to vector<8x32xf32>
    %189 = arith.addf %187, %188 : vector<8x32xf32>
    %190 = arith.negf %189 : vector<8x32xf32>
    %191 = math.exp %190 : vector<8x32xf32>
    %cst_37 = arith.constant 1.000000e+00 : f32
    %192 = vector.broadcast %cst_37 : f32 to vector<8x32xf32>
    %193 = arith.addf %192, %191 : vector<8x32xf32>
    %194 = arith.divf %192, %193 : vector<8x32xf32>
    %195 = vector.extract_strided_slice %185 {offsets = [0, 32], sizes = [8, 32], strides = [1, 1]} : vector<8x96xf32> to vector<8x32xf32>
    %196 = vector.extract_strided_slice %186 {offsets = [0, 32], sizes = [8, 32], strides = [1, 1]} : vector<8x96xf32> to vector<8x32xf32>
    %197 = arith.addf %195, %196 : vector<8x32xf32>
    %198 = arith.negf %197 : vector<8x32xf32>
    %199 = math.exp %198 : vector<8x32xf32>
    %cst_38 = arith.constant 1.000000e+00 : f32
    %200 = vector.broadcast %cst_38 : f32 to vector<8x32xf32>
    %201 = arith.addf %200, %199 : vector<8x32xf32>
    %202 = arith.divf %200, %201 : vector<8x32xf32>
    %203 = vector.extract_strided_slice %185 {offsets = [0, 64], sizes = [8, 32], strides = [1, 1]} : vector<8x96xf32> to vector<8x32xf32>
    %204 = vector.extract_strided_slice %186 {offsets = [0, 64], sizes = [8, 32], strides = [1, 1]} : vector<8x96xf32> to vector<8x32xf32>
    %205 = vector.broadcast %1 : vector<1x32xf32> to vector<8x32xf32>
    %206 = arith.addf %204, %205 : vector<8x32xf32>
    %207 = arith.mulf %194, %206 : vector<8x32xf32>
    %208 = arith.addf %203, %207 : vector<8x32xf32>
    %209 = math.tanh %208 : vector<8x32xf32>
    %210 = arith.subf %182, %209 : vector<8x32xf32>
    %211 = arith.mulf %202, %210 : vector<8x32xf32>
    %212 = arith.addf %209, %211 : vector<8x32xf32>
    %c7_i32 = arith.constant 7 : i32
    %213 = arith.index_cast %c7_i32 : i32 to index
    %c0_39 = arith.constant 0 : index
    %c0_40 = arith.constant 0 : index
    %214 = vector.load %arg1[%213, %c0_39, %c0_40] : memref<8x8x96xf32, #tpu.memory_space<vmem>>, vector<1x8x96xf32>
    %215 = vector.shape_cast %214 : vector<1x8x96xf32> to vector<8x96xf32>
    %cst_41 = arith.constant dense<0.000000e+00> : vector<8x96xf32>
    %216 = tpu.matmul %212, %0, %cst_41 {dimension_numbers = #tpu.dot_dimension_numbers<[1], [0], [0], [1], [0, 0, 1, 1], [], []>} : vector<8x32xf32>, vector<32x96xf32>, vector<8x96xf32> -> vector<8x96xf32>
    %217 = vector.extract_strided_slice %215 {offsets = [0, 0], sizes = [8, 32], strides = [1, 1]} : vector<8x96xf32> to vector<8x32xf32>
    %218 = vector.extract_strided_slice %216 {offsets = [0, 0], sizes = [8, 32], strides = [1, 1]} : vector<8x96xf32> to vector<8x32xf32>
    %219 = arith.addf %217, %218 : vector<8x32xf32>
    %220 = arith.negf %219 : vector<8x32xf32>
    %221 = math.exp %220 : vector<8x32xf32>
    %cst_42 = arith.constant 1.000000e+00 : f32
    %222 = vector.broadcast %cst_42 : f32 to vector<8x32xf32>
    %223 = arith.addf %222, %221 : vector<8x32xf32>
    %224 = arith.divf %222, %223 : vector<8x32xf32>
    %225 = vector.extract_strided_slice %215 {offsets = [0, 32], sizes = [8, 32], strides = [1, 1]} : vector<8x96xf32> to vector<8x32xf32>
    %226 = vector.extract_strided_slice %216 {offsets = [0, 32], sizes = [8, 32], strides = [1, 1]} : vector<8x96xf32> to vector<8x32xf32>
    %227 = arith.addf %225, %226 : vector<8x32xf32>
    %228 = arith.negf %227 : vector<8x32xf32>
    %229 = math.exp %228 : vector<8x32xf32>
    %cst_43 = arith.constant 1.000000e+00 : f32
    %230 = vector.broadcast %cst_43 : f32 to vector<8x32xf32>
    %231 = arith.addf %230, %229 : vector<8x32xf32>
    %232 = arith.divf %230, %231 : vector<8x32xf32>
    %233 = vector.extract_strided_slice %215 {offsets = [0, 64], sizes = [8, 32], strides = [1, 1]} : vector<8x96xf32> to vector<8x32xf32>
    %234 = vector.extract_strided_slice %216 {offsets = [0, 64], sizes = [8, 32], strides = [1, 1]} : vector<8x96xf32> to vector<8x32xf32>
    %235 = vector.broadcast %1 : vector<1x32xf32> to vector<8x32xf32>
    %236 = arith.addf %234, %235 : vector<8x32xf32>
    %237 = arith.mulf %224, %236 : vector<8x32xf32>
    %238 = arith.addf %233, %237 : vector<8x32xf32>
    %239 = math.tanh %238 : vector<8x32xf32>
    %240 = arith.subf %212, %239 : vector<8x32xf32>
    %241 = arith.mulf %232, %240 : vector<8x32xf32>
    %242 = arith.addf %239, %241 : vector<8x32xf32>
    %c8_i32 = arith.constant 8 : i32
    %c0_44 = arith.constant 0 : index
    %c0_45 = arith.constant 0 : index
    %243 = vector.load %arg8[%c0_44, %c0_45] : memref<8x32xf32, #tpu.memory_space<vmem>>, vector<8x32xf32>
    tpu.vector_store %arg8[%c0_44, %c0_45], %242 {strides = array<i32>} : memref<8x32xf32, #tpu.memory_space<vmem>>, vector<8x32xf32>,
    %c0_46 = arith.constant 0 : index
    %c0_47 = arith.constant 0 : index
    %244 = vector.load %arg5[%c0_46, %c0_47] : memref<32x4xf32, #tpu.memory_space<vmem>>, vector<32x4xf32>
    %cst_48 = arith.constant dense<0.000000e+00> : vector<8x4xf32>
    %245 = tpu.matmul %242, %244, %cst_48 {dimension_numbers = #tpu.dot_dimension_numbers<[1], [0], [0], [1], [0, 0, 1, 1], [], []>} : vector<8x32xf32>, vector<32x4xf32>, vector<8x4xf32> -> vector<8x4xf32>
    %c0_49 = arith.constant 0 : index
    %c0_50 = arith.constant 0 : index
    %246 = vector.load %arg6[%c0_49, %c0_50] : memref<1x4xf32, #tpu.memory_space<vmem>>, vector<1x4xf32>
    %247 = vector.broadcast %246 : vector<1x4xf32> to vector<8x4xf32>
    %248 = arith.addf %245, %247 : vector<8x4xf32>
    %c0_51 = arith.constant 0 : index
    %c0_52 = arith.constant 0 : index
    %249 = vector.load %arg7[%c0_51, %c0_52] : memref<8x4xf32, #tpu.memory_space<vmem>>, vector<8x4xf32>
    tpu.vector_store %arg7[%c0_51, %c0_52], %248 {strides = array<i32>} : memref<8x4xf32, #tpu.memory_space<vmem>>, vector<8x4xf32>,
    return
  }
  func.func @transform_0(%arg0: i32) -> (i32, i32, i32) {
    %c0_i32 = arith.constant 0 : i32
    %c0_i32_0 = arith.constant 0 : i32
    %c0_i32_1 = arith.constant 0 : i32
    %c0_i32_2 = arith.constant 0 : i32
    return %c0_i32, %c0_i32_0, %c0_i32_1 : i32, i32, i32
  }
  func.func @transform_1(%arg0: i32) -> (i32, i32) {
    %c0_i32 = arith.constant 0 : i32
    %c0_i32_0 = arith.constant 0 : i32
    %c0_i32_1 = arith.constant 0 : i32
    return %c0_i32, %c0_i32_0 : i32, i32
  }
  func.func @transform_2(%arg0: i32) -> (i32, i32) {
    %c0_i32 = arith.constant 0 : i32
    %c0_i32_0 = arith.constant 0 : i32
    %c0_i32_1 = arith.constant 0 : i32
    return %c0_i32, %c0_i32_0 : i32, i32
  }
  func.func @transform_3(%arg0: i32) -> (i32, i32) {
    %c0_i32 = arith.constant 0 : i32
    %c0_i32_0 = arith.constant 0 : i32
    %c0_i32_1 = arith.constant 0 : i32
    return %c0_i32, %c0_i32_0 : i32, i32
  }
  func.func @transform_4(%arg0: i32) -> (i32, i32) {
    %c0_i32 = arith.constant 0 : i32
    %c0_i32_0 = arith.constant 0 : i32
    %c0_i32_1 = arith.constant 0 : i32
    return %c0_i32, %c0_i32_0 : i32, i32
  }
  func.func @transform_5(%arg0: i32) -> (i32, i32) {
    %c0_i32 = arith.constant 0 : i32
    %c0_i32_0 = arith.constant 0 : i32
    %c0_i32_1 = arith.constant 0 : i32
    return %c0_i32, %c0_i32_0 : i32, i32
  }
  func.func @transform_6(%arg0: i32) -> (i32, i32) {
    %c0_i32 = arith.constant 0 : i32
    %c0_i32_0 = arith.constant 0 : i32
    %c0_i32_1 = arith.constant 0 : i32
    return %c0_i32, %c0_i32_0 : i32, i32
  }
  func.func @transform_7(%arg0: i32) -> (i32, i32) {
    %c0_i32 = arith.constant 0 : i32
    %c0_i32_0 = arith.constant 0 : i32
    %c0_i32_1 = arith.constant 0 : i32
    return %c0_i32, %c0_i32_0 : i32, i32
  }
}

</mosaic_0001>

<llo_original>
// kernel: tpu_custom_call.1
$region0: #{tpu_custom_call.1}
  #allocation0 [shape = 'u32[]', space=smem, size = 0x4, offset = 0x4, fixed_abs, tag = 'smem constant byte address 0x4 - core index']
  #allocation1 [shape = 'u32[144,128]{1,0:T(1,128)}', space=vmem, size = 0x12000, scoped, tag = 'internal scratch']
  %s0 = inlined_call_operand.hbm [shape: f32[8,8,96], index: 0, kind: input, shape index: {}]
  %s1 = inlined_call_operand.vmem [shape: f32[8,32], index: 1, kind: input, shape index: {}]
  %s2 = inlined_call_operand.vmem [shape: f32[32,96], index: 2, kind: input, shape index: {}]
  %s3 = inlined_call_operand.vmem [shape: f32[1,32], index: 3, kind: input, shape index: {}]
  %s4 = inlined_call_operand.vmem [shape: f32[32,4], index: 4, kind: input, shape index: {}]
  %s5 = inlined_call_operand.vmem [shape: f32[1,4], index: 5, kind: input, shape index: {}]
  %s6 = inlined_call_operand.vmem [shape: f32[8,4], index: 6, kind: output, shape index: {0}]
  %s7 = inlined_call_operand.hbm [shape: f32[8,32], index: 7, kind: output, shape index: {1}]
  %8 = xla_tuple %s6, %s7
  %s9 = sld [smem:[#allocation0]]
  $region46: #{tpu_custom_call.1} parent=0
    _
  %s11 = ssub.s32 1, %s9
  %s12 = scalar_select 0, %s11, %s9
  $region1: #{tpu_custom_call.1} parent=0
    #allocation2 [shape = 'u8[32768]{0}', space=vmem, size = 0x8000, scoped, tag = 'input window, operand 0, single buffered']
    #allocation3 [shape = 's32[1]{0}', space=sflag, size = 0x4, scoped, tag = 'scoped memory for tpu_custom_call.1']
    #allocation4 [shape = 's32[1]{0}', space=sflag, size = 0x4, scoped, tag = 'scoped memory for tpu_custom_call.1']
    #allocation5 [shape = 'u8[4096]{0}', space=vmem, size = 0x1000, scoped, tag = 'output window, operand 1, single buffered']
    %13 = vsyncpa [#allocation3], 0
    %14 = vsyncpa [#allocation4], 0
    // Predicated region
    $region2: #{tpu_custom_call.1} parent=1 // pred_check
      _
    $region3: #{tpu_custom_call.1} parent=1 // pred_check_branch
      %16 = sbr.rel (0) target = $region5
    $region4: #{tpu_custom_call.1} parent=1 // pred_region
      %s18 = ssub.s32 1024, 1024
      %19 = vsyncadd [#allocation3], %s18
      %s20 = sshll.u32 [#allocation2], 4
      %s21 = int_to_ptr.vmem [resolvable:$true] %s20
      %26 = dma.hbm_to_vmem [thread:$0]  %s0, 1024, %s21, [#allocation3], 128, 128, 8
    $region5: #{tpu_custom_call.1} parent=1 // pred_fallthru
      _
    // Predicated region
    $region6: #{tpu_custom_call.1} parent=1 // pred_check
      _
    $region7: #{tpu_custom_call.1} parent=1 // pred_check_branch
      %28 = sbr.rel (0) target = $region9
    $region8: #{tpu_custom_call.1} parent=1 // pred_region
      _
    $region9: #{tpu_custom_call.1} parent=1 // pred_fallthru
      _
    // Predicated region
    $region10: #{tpu_custom_call.1} parent=1 // pred_check
      _
    $region11: #{tpu_custom_call.1} parent=1 // pred_check_branch
      %30 = sbr.rel (0) target = $region13
    $region12: #{tpu_custom_call.1} parent=1 // pred_region
      _
    $region13: #{tpu_custom_call.1} parent=1 // pred_fallthru
      _
    // Predicated region
    $region14: #{tpu_custom_call.1} parent=1 // pred_check
      _
    $region15: #{tpu_custom_call.1} parent=1 // pred_check_branch
      %32 = sbr.rel (0) target = $region17
    $region16: #{tpu_custom_call.1} parent=1 // pred_region
      _
    $region17: #{tpu_custom_call.1} parent=1 // pred_fallthru
      _
    // Predicated region
    $region18: #{tpu_custom_call.1} parent=1 // pred_check
      _
    $region19: #{tpu_custom_call.1} parent=1 // pred_check_branch
      %34 = sbr.rel (0) target = $region21
    $region20: #{tpu_custom_call.1} parent=1 // pred_region
      _
    $region21: #{tpu_custom_call.1} parent=1 // pred_fallthru
      _
    // Predicated region
    $region22: #{tpu_custom_call.1} parent=1 // pred_check
      _
    $region23: #{tpu_custom_call.1} parent=1 // pred_check_branch
      %36 = sbr.rel (0) target = $region25
    $region24: #{tpu_custom_call.1} parent=1 // pred_region
      _
    $region25: #{tpu_custom_call.1} parent=1 // pred_fallthru
      _
    // Predicated region
    $region26: #{tpu_custom_call.1} parent=1 // pred_check
      _
    $region27: #{tpu_custom_call.1} parent=1 // pred_check_branch
      %38 = sbr.rel (0) target = $region29
    $region28: #{tpu_custom_call.1} parent=1 // pred_region
      %39 = dma.done [#allocation3], 1024
    $region29: #{tpu_custom_call.1} parent=1 // pred_fallthru
      _
    %v40 = vld [vmem:[%s2] sm:$0xff]
    %v41 = vld [vmem:[%s2 + $0x8] sm:$0xff]
    %v42 = vld [vmem:[%s2 + $0x10] sm:$0xff]
    %v43 = vld [vmem:[%s2 + $0x18] sm:$0xff]
    %v44 = vld [vmem:[%s3] sm:$0x1]
    %v45 = vld [vmem:[%s1] sm:$0xff]
    %v46 = vld [vmem:[#allocation2] sm:$0xff]
    %vm47 = vcmask 261120
    %v49 = vsel %vm47, %v45, 0
    %51 = vmatprep.subr.mxu0 0.0
    %52 = vmatpush1.msra.mxu0 %v40
    %53 = vmatprep.subr.mxu0 0.0
    %54 = vmatpush1.msra.mxu0 %v41
    %55 = vmatprep.subr.mxu0 0.0
    %56 = vmatpush1.msra.mxu0 %v42
    %57 = vmatprep.subr.mxu0 0.0
    %58 = vmatpush1.msra.mxu0 %v43
    %59 = vmatprep.subr.mxu0 0.0
    %60 = vmatpush1.msra.mxu0 0.0
    %61 = vmatprep.subr.mxu0 0.0
    %62 = vmatpush1.msra.mxu0 0.0
    %63 = vmatprep.subr.mxu0 0.0
    %64 = vmatpush1.msra.mxu0 0.0
    %65 = vmatprep.subr.mxu0 0.0
    %66 = vmatpush1.msra.mxu0 0.0
    %67 = vmatprep.subr.mxu0 0.0
    %68 = vmatpush1.msra.mxu0 0.0
    %69 = vmatprep.subr.mxu0 0.0
    %70 = vmatpush1.msra.mxu0 0.0
    %71 = vmatprep.subr.mxu0 0.0
    %72 = vmatpush1.msra.mxu0 0.0
    %73 = vmatprep.subr.mxu0 0.0
    %74 = vmatpush1.msra.mxu0 0.0
    %75 = vmatprep.subr.mxu0 0.0
    %76 = vmatpush1.msra.mxu0 0.0
    %77 = vmatprep.subr.mxu0 0.0
    %78 = vmatpush1.msra.mxu0 0.0
    %79 = vmatprep.subr.mxu0 0.0
    %80 = vmatpush1.msra.mxu0 0.0
    %81 = vmatprep.subr.mxu0 0.0
    %82 = vmatpush1.msra.mxu0 0.0
    %83 = vmatprep.subr.mxu0 0.0
    %84 = vmatpush1.msra.mxu0 0.0
    %85 = vmatprep.subr.mxu0 0.0
    %86 = vmatpush1.msra.mxu0 0.0
    %87 = vmatprep.subr.mxu0 0.0
    %88 = vmatpush1.msra.mxu0 0.0
    %89 = vmatprep.subr.mxu0 0.0
    %90 = vmatpush1.msra.mxu0 0.0
    %91 = vmatprep.subr.mxu0 0.0
    %92 = vmatpush1.msra.mxu0 0.0
    %93 = vmatprep.subr.mxu0 0.0
    %94 = vmatpush1.msra.mxu0 0.0
    %95 = vmatprep.subr.mxu0 0.0
    %96 = vmatpush1.msra.mxu0 0.0
    %97 = vmatprep.subr.mxu0 0.0
    %98 = vmatpush1.msra.mxu0 0.0
    %99 = vmatprep.subr.mxu0 0.0
    %100 = vmatpush1.msra.mxu0 0.0
    %101 = vmatprep.subr.mxu0 0.0
    %102 = vmatpush1.msra.mxu0 0.0
    %103 = vmatprep.subr.mxu0 0.0
    %104 = vmatpush1.msra.mxu0 0.0
    %105 = vmatprep.subr.mxu0 0.0
    %106 = vmatpush1.msra.mxu0 0.0
    %107 = vmatprep.subr.mxu0 0.0
    %108 = vmatpush1.msra.mxu0 0.0
    %109 = vmatprep.subr.mxu0 0.0
    %110 = vmatpush1.msra.mxu0 0.0
    %111 = vmatprep.subr.mxu0 0.0
    %112 = vmatpush1.msra.mxu0 0.0
    %113 = vmatprep.subr.mxu0 0.0
    %114 = vmatpush1.msra.mxu0 0.0
    %115 = vmatprep.mubr.f32.mxu0 0.0
    %116 = vmatmul.mubr.f32.gmra.mrb[0].mxu0 %v49
    %v117 = vpop.f32.mrb[0].mxu0
    %v118 = vadd.f32 0.0, %v117
    %v119 = vpop.f32.mrb[0].mxu0
    %120 = vdwg.mxu0
    %v121 = vadd.f32 %v46, %v118
    %v122 = vxor.u32 %v121, 2147483648
    %v123 = vmul.f32 %v122, 1.442695
    %v124 = vpow.pop %v123
    %v125 = vadd.f32 %v124, 1.0
    %v126 = vrcp.pop %v125
    %v127 = vmul.f32 1.0, %v126
    %v129 = vlaneseq
    %v130 = vshrl.u32 %v129, 7
    %v131 = vsub.s32 0, %v130
    %v132 = vrot.slane %v44, %v131
    %133 = vrot.lane.b32.xlu0 %v132, 64
    %v134 = vpop.permute.xlu0 %133
    %v136 = vadd.f32 %v118, %v134
    %138 = vrot.lane.b32.xlu0 %v136, 64
    %v139 = vpop.permute.xlu0 %138
    %v141 = vmul.f32 %v127, %v139
    %143 = vrot.lane.b32.xlu0 %v141, 64
    %v144 = vpop.permute.xlu0 %143
    %v146 = vadd.f32 %v46, %v144
    %v147 = vtanh.pop %v146
    %149 = vrot.lane.b32.xlu0 %v147, 64
    %v150 = vpop.permute.xlu0 %149
    %v152 = vsub.f32 %v45, %v150
    %154 = vrot.lane.b32.xlu0 %v152, 32
    %v155 = vpop.permute.xlu0 %154
    %v157 = vmul.f32 %v127, %v155
    %159 = vrot.lane.b32.xlu0 %v157, 32
    %v160 = vpop.permute.xlu0 %159
    %v162 = vadd.f32 %v147, %v160
    %s163 = scalar_lea.vmem [#allocation2], 8
    %v164 = vld [vmem:[%s163] sm:$0xff]
    %166 = vrot.lane.b32.xlu0 %v162, 64
    %v167 = vpop.permute.xlu0 %166
    %v168 = vsel %vm47, %v167, 0
    %170 = vmatprep.subr.mxu0 0.0
    %171 = vmatpush1.msra.mxu0 %v40
    %172 = vmatprep.subr.mxu0 0.0
    %173 = vmatpush1.msra.mxu0 %v41
    %174 = vmatprep.subr.mxu0 0.0
    %175 = vmatpush1.msra.mxu0 %v42
    %176 = vmatprep.subr.mxu0 0.0
    %177 = vmatpush1.msra.mxu0 %v43
    %178 = vmatprep.subr.mxu0 0.0
    %179 = vmatpush1.msra.mxu0 0.0
    %180 = vmatprep.subr.mxu0 0.0
    %181 = vmatpush1.msra.mxu0 0.0
    %182 = vmatprep.subr.mxu0 0.0
    %183 = vmatpush1.msra.mxu0 0.0
    %184 = vmatprep.subr.mxu0 0.0
    %185 = vmatpush1.msra.mxu0 0.0
    %186 = vmatprep.subr.mxu0 0.0
    %187 = vmatpush1.msra.mxu0 0.0
    %188 = vmatprep.subr.mxu0 0.0
    %189 = vmatpush1.msra.mxu0 0.0
    %190 = vmatprep.subr.mxu0 0.0
    %191 = vmatpush1.msra.mxu0 0.0
    %192 = vmatprep.subr.mxu0 0.0
    %193 = vmatpush1.msra.mxu0 0.0
    %194 = vmatprep.subr.mxu0 0.0
    %195 = vmatpush1.msra.mxu0 0.0
    %196 = vmatprep.subr.mxu0 0.0
    %197 = vmatpush1.msra.mxu0 0.0
    %198 = vmatprep.subr.mxu0 0.0
    %199 = vmatpush1.msra.mxu0 0.0
    %200 = vmatprep.subr.mxu0 0.0
    %201 = vmatpush1.msra.mxu0 0.0
    %202 = vmatprep.subr.mxu0 0.0
    %203 = vmatpush1.msra.mxu0 0.0
    %204 = vmatprep.subr.mxu0 0.0
    %205 = vmatpush1.msra.mxu0 0.0
    %206 = vmatprep.subr.mxu0 0.0
    %207 = vmatpush1.msra.mxu0 0.0
    %208 = vmatprep.subr.mxu0 0.0
    %209 = vmatpush1.msra.mxu0 0.0
    %210 = vmatprep.subr.mxu0 0.0
    %211 = vmatpush1.msra.mxu0 0.0
    %212 = vmatprep.subr.mxu0 0.0
    %213 = vmatpush1.msra.mxu0 0.0
    %214 = vmatprep.subr.mxu0 0.0
    %215 = vmatpush1.msra.mxu0 0.0
    %216 = vmatprep.subr.mxu0 0.0
    %217 = vmatpush1.msra.mxu0 0.0
    %218 = vmatprep.subr.mxu0 0.0
    %219 = vmatpush1.msra.mxu0 0.0
    %220 = vmatprep.subr.mxu0 0.0
    %221 = vmatpush1.msra.mxu0 0.0
    %222 = vmatprep.subr.mxu0 0.0
    %223 = vmatpush1.msra.mxu0 0.0
    %224 = vmatprep.subr.mxu0 0.0
    %225 = vmatpush1.msra.mxu0 0.0
    %226 = vmatprep.subr.mxu0 0.0
    %227 = vmatpush1.msra.mxu0 0.0
    %228 = vmatprep.subr.mxu0 0.0
    %229 = vmatpush1.msra.mxu0 0.0
    %230 = vmatprep.subr.mxu0 0.0
    %231 = vmatpush1.msra.mxu0 0.0
    %232 = vmatprep.subr.mxu0 0.0
    %233 = vmatpush1.msra.mxu0 0.0
    %234 = vmatprep.mubr.f32.mxu0 0.0
    %235 = vmatmul.mubr.f32.gmra.mrb[0].mxu0 %v168
    %v236 = vpop.f32.mrb[0].mxu0
    %v237 = vadd.f32 0.0, %v236
    %v238 = vpop.f32.mrb[0].mxu0
    %239 = vdwg.mxu0
    %v240 = vadd.f32 %v164, %v237
    %v241 = vxor.u32 %v240, 2147483648
    %v242 = vmul.f32 %v241, 1.442695
    %v243 = vpow.pop %v242
    %v244 = vadd.f32 %v243, 1.0
    %v245 = vrcp.pop %v244
    %v246 = vmul.f32 1.0, %v245
    %v247 = vadd.f32 %v237, %v134
    %249 = vrot.lane.b32.xlu0 %v247, 64
    %v250 = vpop.permute.xlu0 %249
    %v252 = vmul.f32 %v246, %v250
    %254 = vrot.lane.b32.xlu0 %v252, 64
    %v255 = vpop.permute.xlu0 %254
    %v257 = vadd.f32 %v164, %v255
    %v258 = vtanh.pop %v257
    %v259 = vsub.f32 %v162, %v258
    %261 = vrot.lane.b32.xlu0 %v259, 96
    %v262 = vpop.permute.xlu0 %261
    %v264 = vmul.f32 %v246, %v262
    %266 = vrot.lane.b32.xlu0 %v264, 32
    %v267 = vpop.permute.xlu0 %266
    %v269 = vadd.f32 %v258, %v267
    %s270 = scalar_lea.vmem [#allocation2], 16
    %v271 = vld [vmem:[%s270] sm:$0xff]
    %273 = vrot.lane.b32.xlu0 %v269, 64
    %v274 = vpop.permute.xlu0 %273
    %v275 = vsel %vm47, %v274, 0
    %277 = vmatprep.subr.mxu0 0.0
    %278 = vmatpush1.msra.mxu0 %v40
    %279 = vmatprep.subr.mxu0 0.0
    %280 = vmatpush1.msra.mxu0 %v41
    %281 = vmatprep.subr.mxu0 0.0
    %282 = vmatpush1.msra.mxu0 %v42
    %283 = vmatprep.subr.mxu0 0.0
    %284 = vmatpush1.msra.mxu0 %v43
    %285 = vmatprep.subr.mxu0 0.0
    %286 = vmatpush1.msra.mxu0 0.0
    %287 = vmatprep.subr.mxu0 0.0
    %288 = vmatpush1.msra.mxu0 0.0
    %289 = vmatprep.subr.mxu0 0.0
    %290 = vmatpush1.msra.mxu0 0.0
    %291 = vmatprep.subr.mxu0 0.0
    %292 = vmatpush1.msra.mxu0 0.0
    %293 = vmatprep.subr.mxu0 0.0
    %294 = vmatpush1.msra.mxu0 0.0
    %295 = vmatprep.subr.mxu0 0.0
    %296 = vmatpush1.msra.mxu0 0.0
    %297 = vmatprep.subr.mxu0 0.0
    %298 = vmatpush1.msra.mxu0 0.0
    %299 = vmatprep.subr.mxu0 0.0
    %300 = vmatpush1.msra.mxu0 0.0
    %301 = vmatprep.subr.mxu0 0.0
    %302 = vmatpush1.msra.mxu0 0.0
    %303 = vmatprep.subr.mxu0 0.0
    %304 = vmatpush1.msra.mxu0 0.0
    %305 = vmatprep.subr.mxu0 0.0
    %306 = vmatpush1.msra.mxu0 0.0
    %307 = vmatprep.subr.mxu0 0.0
    %308 = vmatpush1.msra.mxu0 0.0
    %309 = vmatprep.subr.mxu0 0.0
    %310 = vmatpush1.msra.mxu0 0.0
    %311 = vmatprep.subr.mxu0 0.0
    %312 = vmatpush1.msra.mxu0 0.0
    %313 = vmatprep.subr.mxu0 0.0
    %314 = vmatpush1.msra.mxu0 0.0
    %315 = vmatprep.subr.mxu0 0.0
    %316 = vmatpush1.msra.mxu0 0.0
    %317 = vmatprep.subr.mxu0 0.0
    %318 = vmatpush1.msra.mxu0 0.0
    %319 = vmatprep.subr.mxu0 0.0
    %320 = vmatpush1.msra.mxu0 0.0
    %321 = vmatprep.subr.mxu0 0.0
    %322 = vmatpush1.msra.mxu0 0.0
    %323 = vmatprep.subr.mxu0 0.0
    %324 = vmatpush1.msra.mxu0 0.0
    %325 = vmatprep.subr.mxu0 0.0
    %326 = vmatpush1.msra.mxu0 0.0
    %327 = vmatprep.subr.mxu0 0.0
    %328 = vmatpush1.msra.mxu0 0.0
    %329 = vmatprep.subr.mxu0 0.0
    %330 = vmatpush1.msra.mxu0 0.0
    %331 = vmatprep.subr.mxu0 0.0
    %332 = vmatpush1.msra.mxu0 0.0
    %333 = vmatprep.subr.mxu0 0.0
    %334 = vmatpush1.msra.mxu0 0.0
    %335 = vmatprep.subr.mxu0 0.0
    %336 = vmatpush1.msra.mxu0 0.0
    %337 = vmatprep.subr.mxu0 0.0
    %338 = vmatpush1.msra.mxu0 0.0
    %339 = vmatprep.subr.mxu0 0.0
    %340 = vmatpush1.msra.mxu0 0.0
    %341 = vmatprep.mubr.f32.mxu0 0.0
    %342 = vmatmul.mubr.f32.gmra.mrb[0].mxu0 %v275
    %v343 = vpop.f32.mrb[0].mxu0
    %v344 = vadd.f32 0.0, %v343
    %v345 = vpop.f32.mrb[0].mxu0
    %346 = vdwg.mxu0
    %v347 = vadd.f32 %v271, %v344
    %v348 = vxor.u32 %v347, 2147483648
    %v349 = vmul.f32 %v348, 1.442695
    %v350 = vpow.pop %v349
    %v351 = vadd.f32 %v350, 1.0
    %v352 = vrcp.pop %v351
    %v353 = vmul.f32 1.0, %v352
    %v354 = vadd.f32 %v344, %v134
    %356 = vrot.lane.b32.xlu0 %v354, 64
    %v357 = vpop.permute.xlu0 %356
    %v359 = vmul.f32 %v353, %v357
    %361 = vrot.lane.b32.xlu0 %v359, 64
    %v362 = vpop.permute.xlu0 %361
    %v364 = vadd.f32 %v271, %v362
    %v365 = vtanh.pop %v364
    %v366 = vsub.f32 %v269, %v365
    %368 = vrot.lane.b32.xlu0 %v366, 96
    %v369 = vpop.permute.xlu0 %368
    %v371 = vmul.f32 %v353, %v369
    %373 = vrot.lane.b32.xlu0 %v371, 32
    %v374 = vpop.permute.xlu0 %373
    %v376 = vadd.f32 %v365, %v374
    %s377 = scalar_lea.vmem [#allocation2], 24
    %v378 = vld [vmem:[%s377] sm:$0xff]
    %380 = vrot.lane.b32.xlu0 %v376, 64
    %v381 = vpop.permute.xlu0 %380
    %v382 = vsel %vm47, %v381, 0
    %384 = vmatprep.subr.mxu0 0.0
    %385 = vmatpush1.msra.mxu0 %v40
    %386 = vmatprep.subr.mxu0 0.0
    %387 = vmatpush1.msra.mxu0 %v41
    %388 = vmatprep.subr.mxu0 0.0
    %389 = vmatpush1.msra.mxu0 %v42
    %390 = vmatprep.subr.mxu0 0.0
    %391 = vmatpush1.msra.mxu0 %v43
    %392 = vmatprep.subr.mxu0 0.0
    %393 = vmatpush1.msra.mxu0 0.0
    %394 = vmatprep.subr.mxu0 0.0
    %395 = vmatpush1.msra.mxu0 0.0
    %396 = vmatprep.subr.mxu0 0.0
    %397 = vmatpush1.msra.mxu0 0.0
    %398 = vmatprep.subr.mxu0 0.0
    %399 = vmatpush1.msra.mxu0 0.0
    %400 = vmatprep.subr.mxu0 0.0
    %401 = vmatpush1.msra.mxu0 0.0
    %402 = vmatprep.subr.mxu0 0.0
    %403 = vmatpush1.msra.mxu0 0.0
    %404 = vmatprep.subr.mxu0 0.0
    %405 = vmatpush1.msra.mxu0 0.0
    %406 = vmatprep.subr.mxu0 0.0
    %407 = vmatpush1.msra.mxu0 0.0
    %408 = vmatprep.subr.mxu0 0.0
    %409 = vmatpush1.msra.mxu0 0.0
    %410 = vmatprep.subr.mxu0 0.0
    %411 = vmatpush1.msra.mxu0 0.0
    %412 = vmatprep.subr.mxu0 0.0
    %413 = vmatpush1.msra.mxu0 0.0
    %414 = vmatprep.subr.mxu0 0.0
    %415 = vmatpush1.msra.mxu0 0.0
    %416 = vmatprep.subr.mxu0 0.0
    %417 = vmatpush1.msra.mxu0 0.0
    %418 = vmatprep.subr.mxu0 0.0
    %419 = vmatpush1.msra.mxu0 0.0
    %420 = vmatprep.subr.mxu0 0.0
    %421 = vmatpush1.msra.mxu0 0.0
    %422 = vmatprep.subr.mxu0 0.0
    %423 = vmatpush1.msra.mxu0 0.0
    %424 = vmatprep.subr.mxu0 0.0
    %425 = vmatpush1.msra.mxu0 0.0
    %426 = vmatprep.subr.mxu0 0.0
    %427 = vmatpush1.msra.mxu0 0.0
    %428 = vmatprep.subr.mxu0 0.0
    %429 = vmatpush1.msra.mxu0 0.0
    %430 = vmatprep.subr.mxu0 0.0
    %431 = vmatpush1.msra.mxu0 0.0
    %432 = vmatprep.subr.mxu0 0.0
    %433 = vmatpush1.msra.mxu0 0.0
    %434 = vmatprep.subr.mxu0 0.0
    %435 = vmatpush1.msra.mxu0 0.0
    %436 = vmatprep.subr.mxu0 0.0
    %437 = vmatpush1.msra.mxu0 0.0
    %438 = vmatprep.subr.mxu0 0.0
    %439 = vmatpush1.msra.mxu0 0.0
    %440 = vmatprep.subr.mxu0 0.0
    %441 = vmatpush1.msra.mxu0 0.0
    %442 = vmatprep.subr.mxu0 0.0
    %443 = vmatpush1.msra.mxu0 0.0
    %444 = vmatprep.subr.mxu0 0.0
    %445 = vmatpush1.msra.mxu0 0.0
    %446 = vmatprep.subr.mxu0 0.0
    %447 = vmatpush1.msra.mxu0 0.0
    %448 = vmatprep.mubr.f32.mxu0 0.0
    %449 = vmatmul.mubr.f32.gmra.mrb[0].mxu0 %v382
    %v450 = vpop.f32.mrb[0].mxu0
    %v451 = vadd.f32 0.0, %v450
    %v452 = vpop.f32.mrb[0].mxu0
    %453 = vdwg.mxu0
    %v454 = vadd.f32 %v378, %v451
    %v455 = vxor.u32 %v454, 2147483648
    %v456 = vmul.f32 %v455, 1.442695
    %v457 = vpow.pop %v456
    %v458 = vadd.f32 %v457, 1.0
    %v459 = vrcp.pop %v458
    %v460 = vmul.f32 1.0, %v459
    %v461 = vadd.f32 %v451, %v134
    %463 = vrot.lane.b32.xlu0 %v461, 64
    %v464 = vpop.permute.xlu0 %463
    %v466 = vmul.f32 %v460, %v464
    %468 = vrot.lane.b32.xlu0 %v466, 64
    %v469 = vpop.permute.xlu0 %468
    %v471 = vadd.f32 %v378, %v469
    %v472 = vtanh.pop %v471
    %v473 = vsub.f32 %v376, %v472
    %475 = vrot.lane.b32.xlu0 %v473, 96
    %v476 = vpop.permute.xlu0 %475
    %v478 = vmul.f32 %v460, %v476
    %480 = vrot.lane.b32.xlu0 %v478, 32
    %v481 = vpop.permute.xlu0 %480
    %v483 = vadd.f32 %v472, %v481
    %s484 = scalar_lea.vmem [#allocation2], 32
    %v485 = vld [vmem:[%s484] sm:$0xff]
    %487 = vrot.lane.b32.xlu0 %v483, 64
    %v488 = vpop.permute.xlu0 %487
    %v489 = vsel %vm47, %v488, 0
    %491 = vmatprep.subr.mxu0 0.0
    %492 = vmatpush1.msra.mxu0 %v40
    %493 = vmatprep.subr.mxu0 0.0
    %494 = vmatpush1.msra.mxu0 %v41
    %495 = vmatprep.subr.mxu0 0.0
    %496 = vmatpush1.msra.mxu0 %v42
    %497 = vmatprep.subr.mxu0 0.0
    %498 = vmatpush1.msra.mxu0 %v43
    %499 = vmatprep.subr.mxu0 0.0
    %500 = vmatpush1.msra.mxu0 0.0
    %501 = vmatprep.subr.mxu0 0.0
    %502 = vmatpush1.msra.mxu0 0.0
    %503 = vmatprep.subr.mxu0 0.0
    %504 = vmatpush1.msra.mxu0 0.0
    %505 = vmatprep.subr.mxu0 0.0
    %506 = vmatpush1.msra.mxu0 0.0
    %507 = vmatprep.subr.mxu0 0.0
    %508 = vmatpush1.msra.mxu0 0.0
    %509 = vmatprep.subr.mxu0 0.0
    %510 = vmatpush1.msra.mxu0 0.0
    %511 = vmatprep.subr.mxu0 0.0
    %512 = vmatpush1.msra.mxu0 0.0
    %513 = vmatprep.subr.mxu0 0.0
    %514 = vmatpush1.msra.mxu0 0.0
    %515 = vmatprep.subr.mxu0 0.0
    %516 = vmatpush1.msra.mxu0 0.0
    %517 = vmatprep.subr.mxu0 0.0
    %518 = vmatpush1.msra.mxu0 0.0
    %519 = vmatprep.subr.mxu0 0.0
    %520 = vmatpush1.msra.mxu0 0.0
    %521 = vmatprep.subr.mxu0 0.0
    %522 = vmatpush1.msra.mxu0 0.0
    %523 = vmatprep.subr.mxu0 0.0
    %524 = vmatpush1.msra.mxu0 0.0
    %525 = vmatprep.subr.mxu0 0.0
    %526 = vmatpush1.msra.mxu0 0.0
    %527 = vmatprep.subr.mxu0 0.0
    %528 = vmatpush1.msra.mxu0 0.0
    %529 = vmatprep.subr.mxu0 0.0
    %530 = vmatpush1.msra.mxu0 0.0
    %531 = vmatprep.subr.mxu0 0.0
    %532 = vmatpush1.msra.mxu0 0.0
    %533 = vmatprep.subr.mxu0 0.0
    %534 = vmatpush1.msra.mxu0 0.0
    %535 = vmatprep.subr.mxu0 0.0
    %536 = vmatpush1.msra.mxu0 0.0
    %537 = vmatprep.subr.mxu0 0.0
    %538 = vmatpush1.msra.mxu0 0.0
    %539 = vmatprep.subr.mxu0 0.0
    %540 = vmatpush1.msra.mxu0 0.0
    %541 = vmatprep.subr.mxu0 0.0
    %542 = vmatpush1.msra.mxu0 0.0
    %543 = vmatprep.subr.mxu0 0.0
    %544 = vmatpush1.msra.mxu0 0.0
    %545 = vmatprep.subr.mxu0 0.0
    %546 = vmatpush1.msra.mxu0 0.0
    %547 = vmatprep.subr.mxu0 0.0
    %548 = vmatpush1.msra.mxu0 0.0
    %549 = vmatprep.subr.mxu0 0.0
    %550 = vmatpush1.msra.mxu0 0.0
    %551 = vmatprep.subr.mxu0 0.0
    %552 = vmatpush1.msra.mxu0 0.0
    %553 = vmatprep.subr.mxu0 0.0
    %554 = vmatpush1.msra.mxu0 0.0
    %555 = vmatprep.mubr.f32.mxu0 0.0
    %556 = vmatmul.mubr.f32.gmra.mrb[0].mxu0 %v489
    %v557 = vpop.f32.mrb[0].mxu0
    %v558 = vadd.f32 0.0, %v557
    %v559 = vpop.f32.mrb[0].mxu0
    %560 = vdwg.mxu0
    %v561 = vadd.f32 %v485, %v558
    %v562 = vxor.u32 %v561, 2147483648
    %v563 = vmul.f32 %v562, 1.442695
    %v564 = vpow.pop %v563
    %v565 = vadd.f32 %v564, 1.0
    %v566 = vrcp.pop %v565
    %v567 = vmul.f32 1.0, %v566
    %v568 = vadd.f32 %v558, %v134
    %570 = vrot.lane.b32.xlu0 %v568, 64
    %v571 = vpop.permute.xlu0 %570
    %v573 = vmul.f32 %v567, %v571
    %575 = vrot.lane.b32.xlu0 %v573, 64
    %v576 = vpop.permute.xlu0 %575
    %v578 = vadd.f32 %v485, %v576
    %v579 = vtanh.pop %v578
    %v580 = vsub.f32 %v483, %v579
    %582 = vrot.lane.b32.xlu0 %v580, 96
    %v583 = vpop.permute.xlu0 %582
    %v585 = vmul.f32 %v567, %v583
    %587 = vrot.lane.b32.xlu0 %v585, 32
    %v588 = vpop.permute.xlu0 %587
    %v590 = vadd.f32 %v579, %v588
    %s591 = scalar_lea.vmem [#allocation2], 40
    %v592 = vld [vmem:[%s591] sm:$0xff]
    %594 = vrot.lane.b32.xlu0 %v590, 64
    %v595 = vpop.permute.xlu0 %594
    %v596 = vsel %vm47, %v595, 0
    %598 = vmatprep.subr.mxu0 0.0
    %599 = vmatpush1.msra.mxu0 %v40
    %600 = vmatprep.subr.mxu0 0.0
    %601 = vmatpush1.msra.mxu0 %v41
    %602 = vmatprep.subr.mxu0 0.0
    %603 = vmatpush1.msra.mxu0 %v42
    %604 = vmatprep.subr.mxu0 0.0
    %605 = vmatpush1.msra.mxu0 %v43
    %606 = vmatprep.subr.mxu0 0.0
    %607 = vmatpush1.msra.mxu0 0.0
    %608 = vmatprep.subr.mxu0 0.0
    %609 = vmatpush1.msra.mxu0 0.0
    %610 = vmatprep.subr.mxu0 0.0
    %611 = vmatpush1.msra.mxu0 0.0
    %612 = vmatprep.subr.mxu0 0.0
    %613 = vmatpush1.msra.mxu0 0.0
    %614 = vmatprep.subr.mxu0 0.0
    %615 = vmatpush1.msra.mxu0 0.0
    %616 = vmatprep.subr.mxu0 0.0
    %617 = vmatpush1.msra.mxu0 0.0
    %618 = vmatprep.subr.mxu0 0.0
    %619 = vmatpush1.msra.mxu0 0.0
    %620 = vmatprep.subr.mxu0 0.0
    %621 = vmatpush1.msra.mxu0 0.0
    %622 = vmatprep.subr.mxu0 0.0
    %623 = vmatpush1.msra.mxu0 0.0
    %624 = vmatprep.subr.mxu0 0.0
    %625 = vmatpush1.msra.mxu0 0.0
    %626 = vmatprep.subr.mxu0 0.0
    %627 = vmatpush1.msra.mxu0 0.0
    %628 = vmatprep.subr.mxu0 0.0
    %629 = vmatpush1.msra.mxu0 0.0
    %630 = vmatprep.subr.mxu0 0.0
    %631 = vmatpush1.msra.mxu0 0.0
    %632 = vmatprep.subr.mxu0 0.0
    %633 = vmatpush1.msra.mxu0 0.0
    %634 = vmatprep.subr.mxu0 0.0
    %635 = vmatpush1.msra.mxu0 0.0
    %636 = vmatprep.subr.mxu0 0.0
    %637 = vmatpush1.msra.mxu0 0.0
    %638 = vmatprep.subr.mxu0 0.0
    %639 = vmatpush1.msra.mxu0 0.0
    %640 = vmatprep.subr.mxu0 0.0
    %641 = vmatpush1.msra.mxu0 0.0
    %642 = vmatprep.subr.mxu0 0.0
    %643 = vmatpush1.msra.mxu0 0.0
    %644 = vmatprep.subr.mxu0 0.0
    %645 = vmatpush1.msra.mxu0 0.0
    %646 = vmatprep.subr.mxu0 0.0
    %647 = vmatpush1.msra.mxu0 0.0
    %648 = vmatprep.subr.mxu0 0.0
    %649 = vmatpush1.msra.mxu0 0.0
    %650 = vmatprep.subr.mxu0 0.0
    %651 = vmatpush1.msra.mxu0 0.0
    %652 = vmatprep.subr.mxu0 0.0
    %653 = vmatpush1.msra.mxu0 0.0
    %654 = vmatprep.subr.mxu0 0.0
    %655 = vmatpush1.msra.mxu0 0.0
    %656 = vmatprep.subr.mxu0 0.0
    %657 = vmatpush1.msra.mxu0 0.0
    %658 = vmatprep.subr.mxu0 0.0
    %659 = vmatpush1.msra.mxu0 0.0
    %660 = vmatprep.subr.mxu0 0.0
    %661 = vmatpush1.msra.mxu0 0.0
    %662 = vmatprep.mubr.f32.mxu0 0.0
    %663 = vmatmul.mubr.f32.gmra.mrb[0].mxu0 %v596
    %v664 = vpop.f32.mrb[0].mxu0
    %v665 = vadd.f32 0.0, %v664
    %v666 = vpop.f32.mrb[0].mxu0
    %667 = vdwg.mxu0
    %v668 = vadd.f32 %v592, %v665
    %v669 = vxor.u32 %v668, 2147483648
    %v670 = vmul.f32 %v669, 1.442695
    %v671 = vpow.pop %v670
    %v672 = vadd.f32 %v671, 1.0
    %v673 = vrcp.pop %v672
    %v674 = vmul.f32 1.0, %v673
    %v675 = vadd.f32 %v665, %v134
    %677 = vrot.lane.b32.xlu0 %v675, 64
    %v678 = vpop.permute.xlu0 %677
    %v680 = vmul.f32 %v674, %v678
    %682 = vrot.lane.b32.xlu0 %v680, 64
    %v683 = vpop.permute.xlu0 %682
    %v685 = vadd.f32 %v592, %v683
    %v686 = vtanh.pop %v685
    %v687 = vsub.f32 %v590, %v686
    %689 = vrot.lane.b32.xlu0 %v687, 96
    %v690 = vpop.permute.xlu0 %689
    %v692 = vmul.f32 %v674, %v690
    %694 = vrot.lane.b32.xlu0 %v692, 32
    %v695 = vpop.permute.xlu0 %694
    %v697 = vadd.f32 %v686, %v695
    %s698 = scalar_lea.vmem [#allocation2], 48
    %v699 = vld [vmem:[%s698] sm:$0xff]
    %701 = vrot.lane.b32.xlu0 %v697, 64
    %v702 = vpop.permute.xlu0 %701
    %v703 = vsel %vm47, %v702, 0
    %705 = vmatprep.subr.mxu0 0.0
    %706 = vmatpush1.msra.mxu0 %v40
    %707 = vmatprep.subr.mxu0 0.0
    %708 = vmatpush1.msra.mxu0 %v41
    %709 = vmatprep.subr.mxu0 0.0
    %710 = vmatpush1.msra.mxu0 %v42
    %711 = vmatprep.subr.mxu0 0.0
    %712 = vmatpush1.msra.mxu0 %v43
    %713 = vmatprep.subr.mxu0 0.0
    %714 = vmatpush1.msra.mxu0 0.0
    %715 = vmatprep.subr.mxu0 0.0
    %716 = vmatpush1.msra.mxu0 0.0
    %717 = vmatprep.subr.mxu0 0.0
    %718 = vmatpush1.msra.mxu0 0.0
    %719 = vmatprep.subr.mxu0 0.0
    %720 = vmatpush1.msra.mxu0 0.0
    %721 = vmatprep.subr.mxu0 0.0
    %722 = vmatpush1.msra.mxu0 0.0
    %723 = vmatprep.subr.mxu0 0.0
    %724 = vmatpush1.msra.mxu0 0.0
    %725 = vmatprep.subr.mxu0 0.0
    %726 = vmatpush1.msra.mxu0 0.0
    %727 = vmatprep.subr.mxu0 0.0
    %728 = vmatpush1.msra.mxu0 0.0
    %729 = vmatprep.subr.mxu0 0.0
    %730 = vmatpush1.msra.mxu0 0.0
    %731 = vmatprep.subr.mxu0 0.0
    %732 = vmatpush1.msra.mxu0 0.0
    %733 = vmatprep.subr.mxu0 0.0
    %734 = vmatpush1.msra.mxu0 0.0
    %735 = vmatprep.subr.mxu0 0.0
    %736 = vmatpush1.msra.mxu0 0.0
    %737 = vmatprep.subr.mxu0 0.0
    %738 = vmatpush1.msra.mxu0 0.0
    %739 = vmatprep.subr.mxu0 0.0
    %740 = vmatpush1.msra.mxu0 0.0
    %741 = vmatprep.subr.mxu0 0.0
    %742 = vmatpush1.msra.mxu0 0.0
    %743 = vmatprep.subr.mxu0 0.0
    %744 = vmatpush1.msra.mxu0 0.0
    %745 = vmatprep.subr.mxu0 0.0
    %746 = vmatpush1.msra.mxu0 0.0
    %747 = vmatprep.subr.mxu0 0.0
    %748 = vmatpush1.msra.mxu0 0.0
    %749 = vmatprep.subr.mxu0 0.0
    %750 = vmatpush1.msra.mxu0 0.0
    %751 = vmatprep.subr.mxu0 0.0
    %752 = vmatpush1.msra.mxu0 0.0
    %753 = vmatprep.subr.mxu0 0.0
    %754 = vmatpush1.msra.mxu0 0.0
    %755 = vmatprep.subr.mxu0 0.0
    %756 = vmatpush1.msra.mxu0 0.0
    %757 = vmatprep.subr.mxu0 0.0
    %758 = vmatpush1.msra.mxu0 0.0
    %759 = vmatprep.subr.mxu0 0.0
    %760 = vmatpush1.msra.mxu0 0.0
    %761 = vmatprep.subr.mxu0 0.0
    %762 = vmatpush1.msra.mxu0 0.0
    %763 = vmatprep.subr.mxu0 0.0
    %764 = vmatpush1.msra.mxu0 0.0
    %765 = vmatprep.subr.mxu0 0.0
    %766 = vmatpush1.msra.mxu0 0.0
    %767 = vmatprep.subr.mxu0 0.0
    %768 = vmatpush1.msra.mxu0 0.0
    %769 = vmatprep.mubr.f32.mxu0 0.0
    %770 = vmatmul.mubr.f32.gmra.mrb[0].mxu0 %v703
    %v771 = vpop.f32.mrb[0].mxu0
    %v772 = vadd.f32 0.0, %v771
    %v773 = vpop.f32.mrb[0].mxu0
    %774 = vdwg.mxu0
    %v775 = vadd.f32 %v699, %v772
    %v776 = vxor.u32 %v775, 2147483648
    %v777 = vmul.f32 %v776, 1.442695
    %v778 = vpow.pop %v777
    %v779 = vadd.f32 %v778, 1.0
    %v780 = vrcp.pop %v779
    %v781 = vmul.f32 1.0, %v780
    %v782 = vadd.f32 %v772, %v134
    %784 = vrot.lane.b32.xlu0 %v782, 64
    %v785 = vpop.permute.xlu0 %784
    %v787 = vmul.f32 %v781, %v785
    %789 = vrot.lane.b32.xlu0 %v787, 64
    %v790 = vpop.permute.xlu0 %789
    %v792 = vadd.f32 %v699, %v790
    %v793 = vtanh.pop %v792
    %v794 = vsub.f32 %v697, %v793
    %796 = vrot.lane.b32.xlu0 %v794, 96
    %v797 = vpop.permute.xlu0 %796
    %v799 = vmul.f32 %v781, %v797
    %801 = vrot.lane.b32.xlu0 %v799, 32
    %v802 = vpop.permute.xlu0 %801
    %v804 = vadd.f32 %v793, %v802
    %s805 = scalar_lea.vmem [#allocation2], 56
    %v806 = vld [vmem:[%s805] sm:$0xff]
    %808 = vrot.lane.b32.xlu0 %v804, 64
    %v809 = vpop.permute.xlu0 %808
    %v810 = vsel %vm47, %v809, 0
    %812 = vmatprep.subr.mxu0 0.0
    %813 = vmatpush1.msra.mxu0 %v40
    %814 = vmatprep.subr.mxu0 0.0
    %815 = vmatpush1.msra.mxu0 %v41
    %816 = vmatprep.subr.mxu0 0.0
    %817 = vmatpush1.msra.mxu0 %v42
    %818 = vmatprep.subr.mxu0 0.0
    %819 = vmatpush1.msra.mxu0 %v43
    %820 = vmatprep.subr.mxu0 0.0
    %821 = vmatpush1.msra.mxu0 0.0
    %822 = vmatprep.subr.mxu0 0.0
    %823 = vmatpush1.msra.mxu0 0.0
    %824 = vmatprep.subr.mxu0 0.0
    %825 = vmatpush1.msra.mxu0 0.0
    %826 = vmatprep.subr.mxu0 0.0
    %827 = vmatpush1.msra.mxu0 0.0
    %828 = vmatprep.subr.mxu0 0.0
    %829 = vmatpush1.msra.mxu0 0.0
    %830 = vmatprep.subr.mxu0 0.0
    %831 = vmatpush1.msra.mxu0 0.0
    %832 = vmatprep.subr.mxu0 0.0
    %833 = vmatpush1.msra.mxu0 0.0
    %834 = vmatprep.subr.mxu0 0.0
    %835 = vmatpush1.msra.mxu0 0.0
    %836 = vmatprep.subr.mxu0 0.0
    %837 = vmatpush1.msra.mxu0 0.0
    %838 = vmatprep.subr.mxu0 0.0
    %839 = vmatpush1.msra.mxu0 0.0
    %840 = vmatprep.subr.mxu0 0.0
    %841 = vmatpush1.msra.mxu0 0.0
    %842 = vmatprep.subr.mxu0 0.0
    %843 = vmatpush1.msra.mxu0 0.0
    %844 = vmatprep.subr.mxu0 0.0
    %845 = vmatpush1.msra.mxu0 0.0
    %846 = vmatprep.subr.mxu0 0.0
    %847 = vmatpush1.msra.mxu0 0.0
    %848 = vmatprep.subr.mxu0 0.0
    %849 = vmatpush1.msra.mxu0 0.0
    %850 = vmatprep.subr.mxu0 0.0
    %851 = vmatpush1.msra.mxu0 0.0
    %852 = vmatprep.subr.mxu0 0.0
    %853 = vmatpush1.msra.mxu0 0.0
    %854 = vmatprep.subr.mxu0 0.0
    %855 = vmatpush1.msra.mxu0 0.0
    %856 = vmatprep.subr.mxu0 0.0
    %857 = vmatpush1.msra.mxu0 0.0
    %858 = vmatprep.subr.mxu0 0.0
    %859 = vmatpush1.msra.mxu0 0.0
    %860 = vmatprep.subr.mxu0 0.0
    %861 = vmatpush1.msra.mxu0 0.0
    %862 = vmatprep.subr.mxu0 0.0
    %863 = vmatpush1.msra.mxu0 0.0
    %864 = vmatprep.subr.mxu0 0.0
    %865 = vmatpush1.msra.mxu0 0.0
    %866 = vmatprep.subr.mxu0 0.0
    %867 = vmatpush1.msra.mxu0 0.0
    %868 = vmatprep.subr.mxu0 0.0
    %869 = vmatpush1.msra.mxu0 0.0
    %870 = vmatprep.subr.mxu0 0.0
    %871 = vmatpush1.msra.mxu0 0.0
    %872 = vmatprep.subr.mxu0 0.0
    %873 = vmatpush1.msra.mxu0 0.0
    %874 = vmatprep.subr.mxu0 0.0
    %875 = vmatpush1.msra.mxu0 0.0
    %876 = vmatprep.mubr.f32.mxu0 0.0
    %877 = vmatmul.mubr.f32.gmra.mrb[0].mxu0 %v810
    %v878 = vpop.f32.mrb[0].mxu0
    %v879 = vadd.f32 0.0, %v878
    %v880 = vpop.f32.mrb[0].mxu0
    %881 = vdwg.mxu0
    %v882 = vadd.f32 %v806, %v879
    %v883 = vxor.u32 %v882, 2147483648
    %v884 = vmul.f32 %v883, 1.442695
    %v885 = vpow.pop %v884
    %v886 = vadd.f32 %v885, 1.0
    %v887 = vrcp.pop %v886
    %v888 = vmul.f32 1.0, %v887
    %v889 = vadd.f32 %v879, %v134
    %891 = vrot.lane.b32.xlu0 %v889, 64
    %v892 = vpop.permute.xlu0 %891
    %v894 = vmul.f32 %v888, %v892
    %896 = vrot.lane.b32.xlu0 %v894, 64
    %v897 = vpop.permute.xlu0 %896
    %v899 = vadd.f32 %v806, %v897
    %v900 = vtanh.pop %v899
    %v901 = vsub.f32 %v804, %v900
    %903 = vrot.lane.b32.xlu0 %v901, 96
    %v904 = vpop.permute.xlu0 %903
    %v906 = vmul.f32 %v888, %v904
    %908 = vrot.lane.b32.xlu0 %v906, 32
    %v909 = vpop.permute.xlu0 %908
    %v911 = vadd.f32 %v900, %v909
    %913 = vrot.lane.b32.xlu0 %v911, 64
    %v914 = vpop.permute.xlu0 %913
    %916 = vst.msk [vmem:[#allocation5] sm:$0xff] %vm47, %v914
    %v917 = vld [vmem:[%s4] sm:$0xff]
    %v918 = vld [vmem:[%s4 + $0x8] sm:$0xff]
    %v919 = vld [vmem:[%s4 + $0x10] sm:$0xff]
    %v920 = vld [vmem:[%s4 + $0x18] sm:$0xff]
    %v921 = vld [vmem:[%s5] sm:$0x1]
    %v923 = vlaneseq
    %v924 = vshrl.u32 %v923, 7
    %v925 = vsub.s32 0, %v924
    %v926 = vrot.slane %v921, %v925
    %v928 = vsel %vm47, %v914, 0
    %930 = vmatprep.subr.mxu0 0.0
    %931 = vmatpush1.msra.mxu0 %v917
    %932 = vmatprep.subr.mxu0 0.0
    %933 = vmatpush1.msra.mxu0 %v918
    %934 = vmatprep.subr.mxu0 0.0
    %935 = vmatpush1.msra.mxu0 %v919
    %936 = vmatprep.subr.mxu0 0.0
    %937 = vmatpush1.msra.mxu0 %v920
    %938 = vmatprep.subr.mxu0 0.0
    %939 = vmatpush1.msra.mxu0 0.0
    %940 = vmatprep.subr.mxu0 0.0
    %941 = vmatpush1.msra.mxu0 0.0
    %942 = vmatprep.subr.mxu0 0.0
    %943 = vmatpush1.msra.mxu0 0.0
    %944 = vmatprep.subr.mxu0 0.0
    %945 = vmatpush1.msra.mxu0 0.0
    %946 = vmatprep.subr.mxu0 0.0
    %947 = vmatpush1.msra.mxu0 0.0
    %948 = vmatprep.subr.mxu0 0.0
    %949 = vmatpush1.msra.mxu0 0.0
    %950 = vmatprep.subr.mxu0 0.0
    %951 = vmatpush1.msra.mxu0 0.0
    %952 = vmatprep.subr.mxu0 0.0
    %953 = vmatpush1.msra.mxu0 0.0
    %954 = vmatprep.subr.mxu0 0.0
    %955 = vmatpush1.msra.mxu0 0.0
    %956 = vmatprep.subr.mxu0 0.0
    %957 = vmatpush1.msra.mxu0 0.0
    %958 = vmatprep.subr.mxu0 0.0
    %959 = vmatpush1.msra.mxu0 0.0
    %960 = vmatprep.subr.mxu0 0.0
    %961 = vmatpush1.msra.mxu0 0.0
    %962 = vmatprep.subr.mxu0 0.0
    %963 = vmatpush1.msra.mxu0 0.0
    %964 = vmatprep.subr.mxu0 0.0
    %965 = vmatpush1.msra.mxu0 0.0
    %966 = vmatprep.subr.mxu0 0.0
    %967 = vmatpush1.msra.mxu0 0.0
    %968 = vmatprep.subr.mxu0 0.0
    %969 = vmatpush1.msra.mxu0 0.0
    %970 = vmatprep.subr.mxu0 0.0
    %971 = vmatpush1.msra.mxu0 0.0
    %972 = vmatprep.subr.mxu0 0.0
    %973 = vmatpush1.msra.mxu0 0.0
    %974 = vmatprep.subr.mxu0 0.0
    %975 = vmatpush1.msra.mxu0 0.0
    %976 = vmatprep.subr.mxu0 0.0
    %977 = vmatpush1.msra.mxu0 0.0
    %978 = vmatprep.subr.mxu0 0.0
    %979 = vmatpush1.msra.mxu0 0.0
    %980 = vmatprep.subr.mxu0 0.0
    %981 = vmatpush1.msra.mxu0 0.0
    %982 = vmatprep.subr.mxu0 0.0
    %983 = vmatpush1.msra.mxu0 0.0
    %984 = vmatprep.subr.mxu0 0.0
    %985 = vmatpush1.msra.mxu0 0.0
    %986 = vmatprep.subr.mxu0 0.0
    %987 = vmatpush1.msra.mxu0 0.0
    %988 = vmatprep.subr.mxu0 0.0
    %989 = vmatpush1.msra.mxu0 0.0
    %990 = vmatprep.subr.mxu0 0.0
    %991 = vmatpush1.msra.mxu0 0.0
    %992 = vmatprep.subr.mxu0 0.0
    %993 = vmatpush1.msra.mxu0 0.0
    %994 = vmatprep.mubr.f32.mxu0 0.0
    %995 = vmatmul.mubr.f32.gmra.mrb[0].mxu0 %v928
    %v996 = vpop.f32.mrb[0].mxu0
    %v997 = vadd.f32 %v926, %v996
    %v998 = vpop.f32.mrb[0].mxu0
    %999 = vdwg.mxu0
    %vm1000 = vcmask 31744
    %1001 = vst.msk [vmem:[%s6] sm:$0xff] %vm1000, %v997
    // Predicated region
    $region30: #{tpu_custom_call.1} parent=1 // pred_check
      _
    $region31: #{tpu_custom_call.1} parent=1 // pred_check_branch
      %1003 = sbr.rel (0) target = $region33
    $region32: #{tpu_custom_call.1} parent=1 // pred_region
      _
    $region33: #{tpu_custom_call.1} parent=1 // pred_fallthru
      _
    // Predicated region
    $region34: #{tpu_custom_call.1} parent=1 // pred_check
      _
    $region35: #{tpu_custom_call.1} parent=1 // pred_check_branch
      %1005 = sbr.rel (0) target = $region37
    $region36: #{tpu_custom_call.1} parent=1 // pred_region
      %s1007 = ssub.s32 128, 128
      %1008 = vsyncadd [#allocation4], %s1007
      %s1010 = sshll.u32 [#allocation5], 4
      %s1011 = int_to_ptr.vmem [resolvable:$true] %s1010
      %1013 = dma.vmem_to_hbm [thread:$0]  %s1011, 128, %s7, [#allocation4]
    $region37: #{tpu_custom_call.1} parent=1 // pred_fallthru
      _
    // Predicated region
    $region38: #{tpu_custom_call.1} parent=1 // pred_check
      _
    $region39: #{tpu_custom_call.1} parent=1 // pred_check_branch
      %1015 = sbr.rel (0) target = $region41
    $region40: #{tpu_custom_call.1} parent=1 // pred_region
      _
    $region41: #{tpu_custom_call.1} parent=1 // pred_fallthru
      _
    // Predicated region
    $region42: #{tpu_custom_call.1} parent=1 // pred_check
      _
    $region43: #{tpu_custom_call.1} parent=1 // pred_check_branch
      %1017 = sbr.rel (0) target = $region45
    $region44: #{tpu_custom_call.1} parent=1 // pred_region
      %1018 = dma.done [#allocation4], 128
    $region45: #{tpu_custom_call.1} parent=1 // pred_fallthru
      _
    %1019 = vsyncpa [#allocation3], 1
    %1020 = vsyncpa [#allocation4], 1

</llo_original>
